<compile_context>
chip_gen: v7x
topology: tpu7x:2x2x1
jax: 0.10.0
libtpu: 0.0.40
codegen_flags: <defaults>
</compile_context>

<pallas_src>
import math

import jax
import jax.numpy as jnp
from jax.experimental import pallas as pl
from jax.experimental.pallas import tpu as pltpu


def _make_embed_kernel(tq, vocab, scale, steps_inner, resident):
    """Build the kernel for one (outer, inner) grid configuration."""

    def kernel(ids_ref, table_hbm, out_ref, row_buf, sems, *res_scratch):
        # ids_ref  : SMEM (m_pad,) int32 token ids (scalar prefetch)
        # table_hbm: HBM  (vocab, d_pad) embedding table (manual DMA only)
        # out_ref  : VMEM (tq, d_pad) output block for this grid step
        # row_buf  : VMEM (2, tq, d_pad) double-buffered gather scratch
        # sems     : DMA sems, one aggregated semaphore per buffer slot
        # res_scratch (resident path only): (table_vmem, tsem)
        c = pl.program_id(0)            # outer (megacore "parallel") chunk
        j = pl.program_id(1)            # inner ("arbitrary") step in chunk
        step = c * steps_inner + j
        slot = j & 1

        if resident:
            table_vmem, tsem = res_scratch
            gather_src = table_vmem     # VMEM-resident table -> cheap gathers
        else:
            gather_src = table_hbm      # per-row HBM gathers

        def issue(s, dst_slot):
            base = s * tq

            @pl.loop(0, tq)
            def _(t):
                # Clamp guards padding / bad ids (PyTorch would raise on OOB).
                tok = jnp.clip(ids_ref[base + t], 0, vocab - 1)
                pltpu.make_async_copy(
                    gather_src.at[pl.ds(tok, 1), :],
                    row_buf.at[dst_slot, pl.ds(t, 1), :],
                    sems.at[dst_slot],
                ).start()

        # Prologue: the first inner step of this core's chunk primes its own
        # pipeline (and, on the resident path, pulls the table into VMEM).
        @pl.when(j == 0)
        def _prologue():
            if resident:
                cp = pltpu.make_async_copy(table_hbm, table_vmem, tsem.at[0])
                cp.start()
                cp.wait()
            issue(step, slot)

        # Cross-step prefetch: issue the NEXT step's row gathers into the
        # other buffer before waiting on this step, hiding DMA latency.
        if steps_inner > 1:
            @pl.when(j + 1 < steps_inner)
            def _prefetch():
                issue(step + 1, 1 - slot)

        # One aggregated wait for all tq row copies of this step: DMA
        # semaphores count bytes, so a (tq, d_pad) descriptor equals the sum
        # of tq (1, d_pad) row copies.  (Dummy src only sizes the wait.)
        pltpu.make_async_copy(
            row_buf.at[1 - slot], row_buf.at[slot], sems.at[slot]
        ).wait()

        # Scale in f32 (VPU work rides under the DMA-bound path) and emit one
        # dense, lane-aligned (tq, d_pad) store.
        out_ref[...] = (row_buf[slot].astype(jnp.float32) * scale).astype(
            out_ref.dtype)

    return kernel


def _embed_chunk(ids, table_p, d_model, scale, tq, resident):
    """Embed one chunk of flat token ids: (m,) -> (m, d_model)."""
    (m,) = ids.shape
    vocab, d_pad = table_p.shape
    itemsize = jnp.dtype(table_p.dtype).itemsize

    outer = 2 if m > tq else 1               # megacore sharding on v7x
    inner = pl.cdiv(m, tq * outer)
    m_pad = outer * inner * tq
    if m_pad != m:
        ids = jnp.pad(ids, (0, m_pad - m))   # pad ids -> row 0, sliced off below

    scratch = [
        pltpu.VMEM((2, tq, d_pad), table_p.dtype),   # double-buffered gather
        pltpu.SemaphoreType.DMA((2,)),               # one aggregated sem/slot
    ]
    if resident:
        scratch += [
            pltpu.VMEM((vocab, d_pad), table_p.dtype),
            pltpu.SemaphoreType.DMA((1,)),
        ]

    table_bytes = vocab * d_pad * itemsize if resident else 0
    vmem_need = 4 * tq * d_pad * itemsize + table_bytes
    vmem_limit = int(min(vmem_need + (16 << 20), 56 << 20))  # v5e default is
    # only 16 MiB scoped; v7x physical is 64 MiB -> stay well under it.

    kernel = _make_embed_kernel(tq, vocab, scale, inner, resident)

    out = pl.pallas_call(
        kernel,
        out_shape=jax.ShapeDtypeStruct((m_pad, d_pad), table_p.dtype),
        grid_spec=pltpu.PrefetchScalarGridSpec(
            num_scalar_prefetch=1,                          # ids -> SMEM
            grid=(outer, inner),
            in_specs=[pl.BlockSpec(memory_space=pl.ANY)],   # table stays in HBM
            out_specs=pl.BlockSpec(
                (tq, d_pad), lambda c, j, ids_ref: (c * inner + j, 0)),
            scratch_shapes=scratch,
        ),
        compiler_params=pltpu.CompilerParams(
            dimension_semantics=("parallel", "arbitrary"),
            vmem_limit_bytes=vmem_limit,
        ),
    )(ids, table_p)

    if m_pad != m or d_pad != d_model:
        out = out[:m, :d_model]
    return out


def embeddings_forward(x, table, *, tq=128, resident=None, ids_per_call=32768):
    """out[...] = table[x[...], :] * sqrt(d_model)   (PyTorch Embeddings)."""
    vocab, d_model = table.shape
    scale = math.sqrt(float(d_model))
    itemsize = jnp.dtype(table.dtype).itemsize

    lead_shape = x.shape
    n = 1
    for s in lead_shape:
        n *= int(s)
    ids = x.reshape(n).astype(jnp.int32)

    # Lane-dense table: pad last dim to a multiple of 128 so the (tq, d_pad)
    # output blocks use unmasked stores.  No-op for typical d_model.
    d_pad = pl.cdiv(d_model, 128) * 128
    table_p = table if d_pad == d_model else jnp.pad(
        table, ((0, 0), (0, d_pad - d_model)))

    # Resident-table fast path when the table comfortably fits VMEM
    # (threshold derived from the generation's VMEM capacity).
    if resident is None:
        try:
            vmem_cap = int(pltpu.get_tpu_info().vmem_capacity_bytes)
        except Exception:
            vmem_cap = 64 << 20
        resident = vocab * d_pad * itemsize <= min(vmem_cap // 4, 16 << 20)

    # Tokens per grid step: dtype-aligned sublane multiple (8 f32 / 16 bf16 /
    # 32 int8), capped so the four gather/output buffers stay within ~8 MiB.
    sub = 8 * max(1, 4 // itemsize)
    max_tq = max(sub, ((8 << 20) // max(1, 4 * d_pad * itemsize)) // sub * sub)
    tq = int(max(sub, min(int(tq), max_tq)))
    tq = pl.cdiv(tq, sub) * sub
    tq = max(sub, min(tq, pl.cdiv(n, sub) * sub))   # don't over-pad tiny inputs

    # Chunk the token stream across pallas_calls so the scalar-prefetched ids
    # (1-D SMEM pads to next_pow2(4N) bytes) never exceed the SMEM budget.
    chunk = max(tq * 2, (int(ids_per_call) // (tq * 2)) * (tq * 2))
    outs = []
    for start in range(0, n, chunk):
        ids_c = ids[start:min(start + chunk, n)]
        outs.append(_embed_chunk(ids_c, table_p, d_model, scale, tq, resident))
    out = outs[0] if len(outs) == 1 else jnp.concatenate(outs, axis=0)
    return out.reshape(*lead_shape, d_model)


if __name__ == "__main__":
    vocab, d_model = 64, 128

    key = jax.random.PRNGKey(0)
    k_tab, k_tok = jax.random.split(key)

    # nn.Embedding default init is N(0, 1) — deterministic synthetic weights.
    table = jax.random.normal(k_tab, (vocab, d_model), dtype=jnp.float32)

    def reference(x):
        return jnp.take(table, x, axis=0) * math.sqrt(float(d_model))

    # Cases: small single-step (auto -> resident path), and a multi-step case
    # that exercises the cross-step prefetch pipeline on both gather paths.
    cases = [((2, 8), None), ((4, 96), False), ((4, 96), True)]
    for (batch, seq), res in cases:
        x = jax.random.randint(k_tok, (batch, seq), 0, vocab, dtype=jnp.int32)
        out = jax.block_until_ready(embeddings_forward(x, table, resident=res))
        assert out.shape == (batch, seq, d_model)
        assert jnp.allclose(out, reference(x), atol=1e-5, rtol=1e-5), (res, batch, seq)

    print("KERNEL_OK")
</pallas_src>

<mosaic_0001>
module attributes {stable_mosaic.version = 11 : i64} {
  func.func @kernel(%arg0: i32, %arg1: i32, %arg2: memref<16xi32, #tpu.memory_space<smem>>, %arg3: memref<64x128xf32, #tpu.memory_space<any>>, %arg4: memref<16x128xf32, #tpu.memory_space<vmem>>, %arg5: memref<2x16x128xf32, #tpu.memory_space<vmem>>, %arg6: memref<2x!tpu.dma_semaphore, #tpu.memory_space<semaphore_mem>>, %arg7: memref<64x128xf32, #tpu.memory_space<vmem>>, %arg8: memref<1x!tpu.dma_semaphore, #tpu.memory_space<semaphore_mem>>) attributes {dimension_semantics = [#tpu.dimension_semantics<parallel>, #tpu.dimension_semantics<arbitrary>], iteration_bounds = array<i64: 1, 1>, scalar_prefetch = 1 : i64, scratch_operands = 4 : i64, tpu.core_type = #tpu.core_type<tc>, window_params = [{}, {transform_indices = @transform_1, window_bounds = array<i64: 16, 128>}]} {
    %c1_i32 = arith.constant 1 : i32
    %0 = arith.muli %arg0, %c1_i32 : i32
    %1 = arith.addi %0, %arg1 : i32
    %c1_i32_0 = arith.constant 1 : i32
    %2 = arith.andi %arg1, %c1_i32_0 : i32
    %c0_i32 = arith.constant 0 : i32
    %3 = arith.cmpi eq, %arg1, %c0_i32 : i32
    %4 = arith.extui %3 : i1 to i32
    %c0_i32_1 = arith.constant 0 : i32
    %5 = arith.cmpi ne, %4, %c0_i32_1 : i32
    scf.if %5 {
      %c0_i32_10 = arith.constant 0 : i32
      %19 = tpu.memref_slice %arg8[%c0_i32_10] : memref<1x!tpu.dma_semaphore, #tpu.memory_space<semaphore_mem>> -> memref<1x!tpu.dma_semaphore, #tpu.memory_space<semaphore_mem>>
      %20 = tpu.memref_squeeze %19 : memref<1x!tpu.dma_semaphore, #tpu.memory_space<semaphore_mem>> -> memref<!tpu.dma_semaphore, #tpu.memory_space<semaphore_mem>>
      tpu.enqueue_dma source(%arg3 : memref<64x128xf32, #tpu.memory_space<any>>) target(%arg7 : memref<64x128xf32, #tpu.memory_space<vmem>>) target_semaphore(%20 : memref<!tpu.dma_semaphore, #tpu.memory_space<semaphore_mem>>)
      %c0_i32_11 = arith.constant 0 : i32
      %21 = tpu.memref_slice %arg8[%c0_i32_11] : memref<1x!tpu.dma_semaphore, #tpu.memory_space<semaphore_mem>> -> memref<1x!tpu.dma_semaphore, #tpu.memory_space<semaphore_mem>>
      %22 = tpu.memref_squeeze %21 : memref<1x!tpu.dma_semaphore, #tpu.memory_space<semaphore_mem>> -> memref<!tpu.dma_semaphore, #tpu.memory_space<semaphore_mem>>
      tpu.wait_dma2 semaphore(%22 : memref<!tpu.dma_semaphore, #tpu.memory_space<semaphore_mem>>) src(%arg3 : memref<64x128xf32, #tpu.memory_space<any>>) dst(%arg7 : memref<64x128xf32, #tpu.memory_space<vmem>>)
      %c16_i32 = arith.constant 16 : i32
      %23 = arith.muli %1, %c16_i32 : i32
      %c0_i32_12 = arith.constant 0 : i32
      %c16_i32_13 = arith.constant 16 : i32
      %24 = arith.addi %c0_i32_12, %c16_i32_13 : i32
      %c1_i32_14 = arith.constant 1 : i32
      scf.for %arg9 = %c0_i32_12 to %24 step %c1_i32_14  : i32 {
        %c1_i32_16 = arith.constant 1 : i32
        %25 = arith.muli %arg9, %c1_i32_16 : i32
        %c0_i32_17 = arith.constant 0 : i32
        %26 = arith.addi %c0_i32_17, %25 : i32
        %27 = arith.addi %23, %26 : i32
        %28 = arith.index_cast %27 : i32 to index
        %29 = memref.load %arg2[%28] : memref<16xi32, #tpu.memory_space<smem>>
        %c0_i32_18 = arith.constant 0 : i32
        %c63_i32 = arith.constant 63 : i32
        %30 = arith.maxsi %c0_i32_18, %29 : i32
        %31 = arith.minsi %c63_i32, %30 : i32
        %c0_i32_19 = arith.constant 0 : i32
        %32 = tpu.memref_slice %arg7[%31, %c0_i32_19] : memref<64x128xf32, #tpu.memory_space<vmem>> -> memref<1x128xf32, #tpu.memory_space<vmem>>
        %c0_i32_20 = arith.constant 0 : i32
        %33 = tpu.memref_slice %arg5[%2, %26, %c0_i32_20] : memref<2x16x128xf32, #tpu.memory_space<vmem>> -> memref<1x1x128xf32, #tpu.memory_space<vmem>>
        %34 = tpu.memref_squeeze %33 : memref<1x1x128xf32, #tpu.memory_space<vmem>> -> memref<1x128xf32, #tpu.memory_space<vmem>>
        %35 = tpu.memref_slice %arg6[%2] : memref<2x!tpu.dma_semaphore, #tpu.memory_space<semaphore_mem>> -> memref<1x!tpu.dma_semaphore, #tpu.memory_space<semaphore_mem>>
        %36 = tpu.memref_squeeze %35 : memref<1x!tpu.dma_semaphore, #tpu.memory_space<semaphore_mem>> -> memref<!tpu.dma_semaphore, #tpu.memory_space<semaphore_mem>>
        tpu.enqueue_dma source(%32 : memref<1x128xf32, #tpu.memory_space<vmem>>) target(%34 : memref<1x128xf32, #tpu.memory_space<vmem>>) target_semaphore(%36 : memref<!tpu.dma_semaphore, #tpu.memory_space<semaphore_mem>>)
      }
      %c16_i32_15 = arith.constant 16 : i32
    } else {
    }
    %c1_i32_2 = arith.constant 1 : i32
    %6 = arith.subi %c1_i32_2, %2 : i32
    %c0_i32_3 = arith.constant 0 : i32
    %c0_i32_4 = arith.constant 0 : i32
    %7 = tpu.memref_slice %arg5[%6, %c0_i32_3, %c0_i32_4] : memref<2x16x128xf32, #tpu.memory_space<vmem>> -> memref<1x16x128xf32, #tpu.memory_space<vmem>>
    %8 = tpu.memref_squeeze %7 : memref<1x16x128xf32, #tpu.memory_space<vmem>> -> memref<16x128xf32, #tpu.memory_space<vmem>>
    %c0_i32_5 = arith.constant 0 : i32
    %c0_i32_6 = arith.constant 0 : i32
    %9 = tpu.memref_slice %arg5[%2, %c0_i32_5, %c0_i32_6] : memref<2x16x128xf32, #tpu.memory_space<vmem>> -> memref<1x16x128xf32, #tpu.memory_space<vmem>>
    %10 = tpu.memref_squeeze %9 : memref<1x16x128xf32, #tpu.memory_space<vmem>> -> memref<16x128xf32, #tpu.memory_space<vmem>>
    %11 = tpu.memref_slice %arg6[%2] : memref<2x!tpu.dma_semaphore, #tpu.memory_space<semaphore_mem>> -> memref<1x!tpu.dma_semaphore, #tpu.memory_space<semaphore_mem>>
    %12 = tpu.memref_squeeze %11 : memref<1x!tpu.dma_semaphore, #tpu.memory_space<semaphore_mem>> -> memref<!tpu.dma_semaphore, #tpu.memory_space<semaphore_mem>>
    tpu.wait_dma2 semaphore(%12 : memref<!tpu.dma_semaphore, #tpu.memory_space<semaphore_mem>>) src(%8 : memref<16x128xf32, #tpu.memory_space<vmem>>) dst(%10 : memref<16x128xf32, #tpu.memory_space<vmem>>)
    %13 = arith.index_cast %2 : i32 to index
    %c0 = arith.constant 0 : index
    %c0_7 = arith.constant 0 : index
    %14 = vector.load %arg5[%13, %c0, %c0_7] : memref<2x16x128xf32, #tpu.memory_space<vmem>>, vector<1x16x128xf32>
    %15 = vector.shape_cast %14 : vector<1x16x128xf32> to vector<16x128xf32>
    %cst = arith.constant 11.3137083 : f32
    %16 = vector.broadcast %cst : f32 to vector<16x128xf32>
    %17 = arith.mulf %15, %16 : vector<16x128xf32>
    %c0_8 = arith.constant 0 : index
    %c0_9 = arith.constant 0 : index
    %18 = vector.load %arg4[%c0_8, %c0_9] : memref<16x128xf32, #tpu.memory_space<vmem>>, vector<16x128xf32>
    tpu.vector_store %arg4[%c0_8, %c0_9], %17 {strides = array<i32>} : memref<16x128xf32, #tpu.memory_space<vmem>>, vector<16x128xf32>,
    return
  }
  func.func @transform_1(%arg0: i32, %arg1: i32, %arg2: memref<16xi32, #tpu.memory_space<smem>>) -> (i32, i32) {
    %c1_i32 = arith.constant 1 : i32
    %0 = arith.muli %arg0, %c1_i32 : i32
    %1 = arith.addi %0, %arg1 : i32
    %c0_i32 = arith.constant 0 : i32
    %c0_i32_0 = arith.constant 0 : i32
    return %1, %c0_i32 : i32, i32
  }
}

</mosaic_0001>

<llo_original>
// kernel: tpu_custom_call.1
$region0: #{tpu_custom_call.1}
  #allocation0 [shape = 'u32[]', space=smem, size = 0x4, offset = 0x4, fixed_abs, tag = 'smem constant byte address 0x4 - core index']
  #allocation1 [shape = 'u32[144,128]{1,0:T(1,128)}', space=vmem, size = 0x12000, scoped, tag = 'internal scratch']
  #allocation2 [shape = 'f32[2,16,128]{2,1,0:T(8,128)}', space=vmem, size = 0x4000, scoped, tag = 'scratch operand']
  #allocation3 [shape = 's32[2]{0}', space=sflag, size = 0x8, scoped, tag = 'scratch operand']
  #allocation4 [shape = 'f32[64,128]{1,0:T(8,128)}', space=vmem, size = 0x8000, scoped, tag = 'scratch operand']
  #allocation5 [shape = 's32[1]{0}', space=sflag, size = 0x4, scoped, tag = 'scratch operand']
  #allocation6 [shape = 's32[1]{0}', space=sflag, size = 0x4, scoped, tag = 'scoped memory for tpu_custom_call.1']
  #allocation7 [shape = 'u8[512]{0}', space=smem, size = 0x200, scoped, tag = 'prefetched SMEM operand 0']
  #allocation10 [shape = 's32[]', space=sflag, size = 0x4, offset = 0, fixed_abs, tag = 'sflag constant byte address 0x0 - dummy sync flag']
  #allocation11 [shape = 's32[]', space=sflag, size = 0x4, offset = 0, fixed_abs, tag = 'sflag constant byte address 0x0 - dummy sync flag']
  #allocation12 [shape = 'u32[]', space=smem, size = 0x4, offset = 0x44, fixed_abs, tag = 'smem constant byte address 0x44 - assertion arg 0']
  #allocation13 [shape = 'u32[]', space=smem, size = 0x4, offset = 0x48, fixed_abs, tag = 'smem constant byte address 0x48 - assertion arg 1']
  #allocation14 [shape = 's32[]', space=sflag, size = 0x4, offset = 0, fixed_abs, tag = 'sflag constant byte address 0x0 - dummy sync flag']
  %s0 = inlined_call_operand.hbm [shape: s32[16], index: 0, kind: input, shape index: {}]
  %s1 = inlined_call_operand.hbm [shape: f32[64,128], index: 1, kind: input, shape index: {}]
  %s2 = inlined_call_operand.hbm [shape: f32[16,128], index: 2, kind: output, shape index: {}]
  %s3 = sld [smem:[#allocation0]]
  $region55: #{tpu_custom_call.1} parent=0
    _
  %s5 = ssub.s32 1, %s3
  %s6 = scalar_select 0, %s5, %s3
  %8 = dma.hbm_to_smem %s0, 16, [#allocation7], [#allocation6]
  %9 = dma.done [#allocation6], 16
  %10 = sfence
  $region1: #{tpu_custom_call.1} parent=0
    #allocation8 [shape = 'u8[8192]{0}', space=vmem, size = 0x2000, scoped, tag = 'output window, operand 0, single buffered']
    #allocation9 [shape = 's32[1]{0}', space=sflag, size = 0x4, scoped, tag = 'scoped memory for tpu_custom_call.1']
    %11 = vsyncpa [#allocation9], 0
    %s12 = sadd.s32 0, 0
    %s13 = smul.u32 2, %s12
    %s14 = sadd.s32 0, 0
    %s15 = sand.u32 0, 1
    %p16 = scmp.eq.s32.totalorder 0, 0
    // Predicated region
    $region2: #{tpu_custom_call.1} parent=1 // pred_check
      %p17 = pneg %p16
    $region3: #{tpu_custom_call.1} parent=1 // pred_check_branch
      %19 = sbr.rel (%p17) target = $region5
    $region4: #{tpu_custom_call.1} parent=1 // pred_region
      // Predicated region
      $region6: #{tpu_custom_call.1} parent=4 // pred_check
        _
      $region7: #{tpu_custom_call.1} parent=4 // pred_check_branch
        %21 = sbr.rel target = $region9
      $region8: #{tpu_custom_call.1} parent=4 // pred_region
        %22 = sst [smem:[#allocation12]] [#allocation11]
        %23 = sst [smem:[#allocation13]] [#allocation10]
      $region9: #{tpu_custom_call.1} parent=4 // pred_fallthru
        _
      %25 = shalt.err (0)
      %s27 = sshll.u32 [#allocation4], 4
      %s28 = int_to_ptr.vmem [resolvable:$true] %s27
      %30 = dma.hbm_to_vmem [thread:$0]  %s1, 1024, %s28, [#allocation5]
      %s31 = smul.u32 64, 1
      %s32 = sshll.u32 %s31, 4
      %33 = dma.done [#allocation5], %s32
      %s34 = smul.u32 %s14, 16
      loop: start=0, step=1, limit=16
      $region10: #{tpu_custom_call.1} parent=4 // loop_pre_header
        _
      $region11: #{tpu_custom_call.1} parent=4 // loop_header
        %s36 = sphi 0, %s40
        %p37 = scmp.ge.s32.totalorder %s36, 16
      $region12: #{tpu_custom_call.1} parent=4 // loop_header_branch
        %39 = sbr.rel (%p37) target = $region16
      $region13: #{tpu_custom_call.1} parent=4 // loop_body
        %s41 = sadd.s32 %s34, %s36
        %s42 = sld [smem:[#allocation7 + %s41]]
        %p43 = scmp.gt.s32.totalorder %s42, 0
        %s44 = scalar_select %p43, %s42, 0
        %p45 = scmp.lt.s32.totalorder %s44, 63
        %s46 = scalar_select %p45, %s44, 63
        %s47 = scalar_lea.vmem [#allocation4], %s46
        %s48 = smul.u32 %s15, 16
        %s49 = sadd.s32 %s36, %s48
        %s50 = scalar_lea.vmem [#allocation2], %s49
        %s51 = scalar_lea.sflag [#allocation3], %s15
        %p53 = scmp.lt.u32.totalorder 1, 8
        %p54 = pneg %p53
        // Predicated region
        $region17: #{tpu_custom_call.1} parent=13 // pred_check
          _
        $region18: #{tpu_custom_call.1} parent=13 // pred_check_branch
          %56 = sbr.rel (%p53) target = $region20
        $region19: #{tpu_custom_call.1} parent=13 // pred_region
          %s71 = sand.u32 1, 7
          %p72 = scmp.eq.s32.totalorder %s71, 0
          %p73 = pneg %p72
          // Predicated region
          $region32: #{tpu_custom_call.1} parent=19 // pred_check
            _
          $region33: #{tpu_custom_call.1} parent=19 // pred_check_branch
            %75 = sbr.rel (%p72) target = $region35
          $region34: #{tpu_custom_call.1} parent=19 // pred_region
            %s76 = sand.u32 1, 7
            %s77 = ssub.s32 1, %s76
            %s78 = scalar_lea.vmem %s47, %s77 [#allocation4]
            %s79 = ssub.s32 1, %s76
            %s80 = scalar_lea.vmem %s50, %s79 [#allocation2]
            %s81 = sshllo.u32 0, %s76
            loop: start=0, step=1, limit=1
            $region36: #{tpu_custom_call.1} parent=34 // loop_pre_header
              _
            $region37: #{tpu_custom_call.1} parent=34 // loop_header
              %s83 = sphi 0, %s87
              %p84 = scmp.ge.s32.totalorder %s83, 1
              %s88 = sphi %s78, %s78
              %s89 = sphi %s80, %s80
            $region38: #{tpu_custom_call.1} parent=34 // loop_header_branch
              %86 = sbr.rel (%p84) target = $region42
            $region39: #{tpu_custom_call.1} parent=34 // loop_body
              %v90 = vld [vmem:[%s88] sm:%s81]
              %91 = vst [vmem:[%s89] sm:%s81] %v90
            $region40: #{tpu_custom_call.1} parent=34 // loop_footer
              %s87 = sadd.s32 1, %s83
            $region41: #{tpu_custom_call.1} parent=34 // loop_footer_branch
              %82 = sbr.rel target = $region37
            $region42: #{tpu_custom_call.1} parent=34 // loop_exit
              _
          $region35: #{tpu_custom_call.1} parent=19 // pred_fallthru
            _
        $region20: #{tpu_custom_call.1} parent=13 // pred_fallthru
          _
        // Predicated region
        $region21: #{tpu_custom_call.1} parent=13 // pred_check
          %p57 = pneg %p53
        $region22: #{tpu_custom_call.1} parent=13 // pred_check_branch
          %59 = sbr.rel (%p57) target = $region24
        $region23: #{tpu_custom_call.1} parent=13 // pred_region
          %s60 = sshllo.u32 0, 1
          loop: start=0, step=1, limit=1
          $region25: #{tpu_custom_call.1} parent=23 // loop_pre_header
            _
          $region26: #{tpu_custom_call.1} parent=23 // loop_header
            %s62 = sphi 0, %s66
            %p63 = scmp.ge.s32.totalorder %s62, 1
            %s67 = sphi %s47, %s47
            %s68 = sphi %s50, %s50
          $region27: #{tpu_custom_call.1} parent=23 // loop_header_branch
            %65 = sbr.rel (%p63) target = $region31
          $region28: #{tpu_custom_call.1} parent=23 // loop_body
            %v69 = vld [vmem:[%s67] sm:%s60]
            %70 = vst [vmem:[%s68] sm:%s60] %v69
          $region29: #{tpu_custom_call.1} parent=23 // loop_footer
            %s66 = sadd.s32 1, %s62
          $region30: #{tpu_custom_call.1} parent=23 // loop_footer_branch
            %61 = sbr.rel target = $region26
          $region31: #{tpu_custom_call.1} parent=23 // loop_exit
            _
        $region24: #{tpu_custom_call.1} parent=13 // pred_fallthru
          _
        // Predicated region
        $region43: #{tpu_custom_call.1} parent=13 // pred_check
          _
        $region44: #{tpu_custom_call.1} parent=13 // pred_check_branch
          %94 = sbr.rel (0) target = $region46
        $region45: #{tpu_custom_call.1} parent=13 // pred_region
          %95 = vsyncadd %s51, 16
        $region46: #{tpu_custom_call.1} parent=13 // pred_fallthru
          _
      $region14: #{tpu_custom_call.1} parent=4 // loop_footer
        %s40 = sadd.s32 1, %s36
      $region15: #{tpu_custom_call.1} parent=4 // loop_footer_branch
        %35 = sbr.rel target = $region11
      $region16: #{tpu_custom_call.1} parent=4 // loop_exit
        _
    $region5: #{tpu_custom_call.1} parent=1 // pred_fallthru
      _
    %s96 = smul.u32 %s15, 16
    %s97 = scalar_lea.vmem [#allocation2], %s96
    %s98 = scalar_lea.sflag [#allocation3], %s15
    %s99 = smul.u32 16, 1
    %s100 = sshll.u32 %s99, 4
    %101 = dma.done %s98, %s100
    %v102 = vld [vmem:[%s97] sm:$0xff]
    %v103 = vld [vmem:[%s97 + $0x8] sm:$0xff]
    %v104 = vmul.f32 %v102, 11.313708
    %v105 = vmul.f32 %v103, 11.313708
    %106 = vst [vmem:[#allocation8] sm:$0xff] %v104
    %107 = vst [vmem:[#allocation8 + $0x8] sm:$0xff] %v105
    // Predicated region
    $region47: #{tpu_custom_call.1} parent=1 // pred_check
      _
    $region48: #{tpu_custom_call.1} parent=1 // pred_check_branch
      %109 = sbr.rel (0) target = $region50
    $region49: #{tpu_custom_call.1} parent=1 // pred_region
      %s110 = sadd.s32 0, 0
      %s111 = smul.u32 2, %s110
      %s113 = ssub.s32 256, 256
      %114 = vsyncadd [#allocation9], %s113
      %s115 = smul.addr %s111, 128
      %s116 = scalar_lea.hbm %s2, %s115
      %s117 = sshll.u32 [#allocation8], 4
      %s118 = int_to_ptr.vmem [resolvable:$true] %s117
      %123 = dma.vmem_to_hbm [thread:$0]  %s118, 256, %s116, [#allocation9], 128, 128, 8
    $region50: #{tpu_custom_call.1} parent=1 // pred_fallthru
      _
    // Predicated region
    $region51: #{tpu_custom_call.1} parent=1 // pred_check
      _
    $region52: #{tpu_custom_call.1} parent=1 // pred_check_branch
      %125 = sbr.rel (0) target = $region54
    $region53: #{tpu_custom_call.1} parent=1 // pred_region
      %126 = dma.done [#allocation9], 256
    $region54: #{tpu_custom_call.1} parent=1 // pred_fallthru
      _
    %127 = vsyncpa [#allocation9], 1
  %128 = vsyncmov [#allocation3]
  %s129 = vpop.sfrf %128
  %p130 = scmp.eq.s32.totalorder %s129, 0
  %p131 = pneg %p130
  %133 = shalt.err (%p131)
  %s134 = scalar_lea.sflag [#allocation3], 1
  %135 = vsyncmov %s134
  %s136 = vpop.sfrf %135
  %p137 = scmp.eq.s32.totalorder %s136, 0
  %p138 = pneg %p137
  %140 = shalt.err (%p138)
  %141 = vsyncmov [#allocation5]
  %s142 = vpop.sfrf %141
  %p143 = scmp.eq.s32.totalorder %s142, 0
  %p144 = pneg %p143
  %146 = shalt.err (%p144)

</llo_original>
